<compile_context>
chip_gen: v7x
topology: tpu7x:2x2x1
jax: 0.10.0
libtpu: 0.0.40
codegen_flags: <defaults>
</compile_context>

<pallas_src>
import jax
import jax.numpy as jnp
from jax.experimental import pallas as pl
from jax.experimental.pallas import tpu as pltpu


def _round_up(x, m):
    return (x + m - 1) // m * m


def _pe_kernel_single_k(patches_ref, w_ref, pos_ref, out_ref):
    # patches_ref: (S_tile, K_pad) bf16 (leading batch dim squeezed)
    # w_ref:       (K_pad, E_pad)  bf16
    # pos_ref:     (S_tile, E_pad) f32   positions with cls/bias folded in
    # out_ref:     (S_tile, E_pad) out_dtype
    out_ref[...] = (
        jnp.dot(patches_ref[...], w_ref[...], preferred_element_type=jnp.float32)
        + pos_ref[...]
    ).astype(out_ref.dtype)


def _pe_kernel_multi_k(patches_ref, w_ref, pos_ref, out_ref, acc_ref):
    # K is tiled: f32 VMEM accumulator, write-on-first-k (no zero-init pass).
    k = pl.program_id(2)
    prod = jnp.dot(patches_ref[...], w_ref[...], preferred_element_type=jnp.float32)

    @pl.when(k == 0)
    def _():
        acc_ref[...] = prod

    @pl.when(k > 0)
    def _():
        acc_ref[...] += prod

    @pl.when(k == pl.num_programs(2) - 1)
    def _():
        # single aligned, lane-dense full-tile store
        out_ref[...] = (acc_ref[...] + pos_ref[...]).astype(out_ref.dtype)


def patch_embedding(x, conv_w, conv_b, cls_token, positions, patch_size,
                    *, s_tile_cap=512, k_tile_cap=1024, out_dtype=jnp.bfloat16):
    """x: (B, C, H, W) float32. Returns (B, N+1, E) in `out_dtype` (bf16 default)."""
    B, C, H, W = x.shape
    ps = patch_size
    Hn, Wn = H // ps, W // ps
    N = Hn * Wn
    E = conv_w.shape[0]
    K = C * ps * ps
    S = N + 1                                   # tokens per image (cls + patches)

    # ---- tile sizing (lane-dense E, bf16-friendly S tile, K tiled if large) ----
    E_pad = _round_up(E, 128)
    K_tile = min(_round_up(K, 128), k_tile_cap)
    K_pad = _round_up(K, K_tile)
    S_tile = min(_round_up(S, 16), s_tile_cap)
    S_pad = _round_up(S, S_tile)
    n_s = S_pad // S_tile
    n_k = K_pad // K_tile

    # ---- host glue: im2col + cls zero-row + padding + bf16 cast in one pass ----
    # per-patch flatten order (c, i, j), row-major patch order (h, w) to match Conv2d.
    # TODO(synk): accept NHWC input (or DMA-gather patch rows in-kernel) to remove
    # this host-side transpose.
    patches = x.reshape(B, C, Hn, ps, Wn, ps)
    patches = patches.transpose(0, 2, 4, 1, 3, 5).reshape(B, N, K)
    patches = jnp.pad(
        patches, ((0, 0), (1, S_pad - S), (0, K_pad - K))   # 1 leading zero row = cls
    ).astype(jnp.bfloat16)                                   # (B, S_pad, K_pad)

    # conv weight (E, C, ps, ps) -> (K_pad, E_pad) bf16
    w = jnp.pad(conv_w.reshape(E, K).T,
                ((0, K_pad - K), (0, E_pad - E))).astype(jnp.bfloat16)

    # effective positions: bias folded into patch rows, cls token into row 0.
    # Small (S_pad, E_pad) f32 table -- shared across the batch (no B-fold tile).
    pos_eff = positions.reshape(S, E).astype(jnp.float32)
    pos_eff = pos_eff.at[1:].add(conv_b.astype(jnp.float32)[None, :])
    pos_eff = pos_eff.at[0].add(cls_token.reshape(E).astype(jnp.float32))
    pos_eff = jnp.pad(pos_eff, ((0, S_pad - S), (0, E_pad - E)))  # (S_pad, E_pad)

    out_bytes = jnp.dtype(out_dtype).itemsize

    if n_k == 1:
        kernel = _pe_kernel_single_k
        grid = (B, n_s)
        in_specs = [
            pl.BlockSpec((None, S_tile, K_pad), lambda b, s: (b, s, 0)),   # patches
            pl.BlockSpec((K_pad, E_pad), lambda b, s: (0, 0)),             # weight (resident)
            pl.BlockSpec((S_tile, E_pad), lambda b, s: (s, 0)),            # folded positions
        ]
        out_specs = pl.BlockSpec((None, S_tile, E_pad), lambda b, s: (b, s, 0))
        scratch_shapes = []
        dim_sem = ("parallel", "parallel")
    else:
        kernel = _pe_kernel_multi_k
        grid = (B, n_s, n_k)                                 # reduction axis last
        in_specs = [
            pl.BlockSpec((None, S_tile, K_tile), lambda b, s, k: (b, s, k)),
            pl.BlockSpec((K_tile, E_pad), lambda b, s, k: (k, 0)),
            pl.BlockSpec((S_tile, E_pad), lambda b, s, k: (s, 0)),
        ]
        out_specs = pl.BlockSpec((None, S_tile, E_pad), lambda b, s, k: (b, s, 0))
        scratch_shapes = [pltpu.VMEM((S_tile, E_pad), jnp.float32)]
        dim_sem = ("parallel", "parallel", "arbitrary")

    grid_spec = pltpu.PrefetchScalarGridSpec(
        num_scalar_prefetch=0,
        grid=grid,
        in_specs=in_specs,
        out_specs=out_specs,
        scratch_shapes=scratch_shapes,
    )

    # accurate (advisory) HBM traffic: weight re-streamed per (b, s) tile iff K is tiled
    w_reads = 1 if n_k == 1 else B * n_s
    pos_bytes = (S_pad if n_s == 1 else B * S_pad) * E_pad * 4
    cost = pl.CostEstimate(
        flops=2 * B * S_pad * K_pad * E_pad,
        transcendentals=0,
        bytes_accessed=(B * S_pad * K_pad * 2           # patches (bf16)
                        + w_reads * K_pad * E_pad * 2   # weight (bf16)
                        + pos_bytes                     # folded positions (f32)
                        + B * S_pad * E_pad * out_bytes),
    )

    # explicit VMEM budget: double-buffered blocks + accumulator, with headroom;
    # keeps the same tiling legal on v5e (16 MiB default scoped) and v7x (64 MiB phys).
    vmem_est = (2 * S_tile * K_tile * 2
                + 2 * K_tile * E_pad * 2
                + 2 * S_tile * E_pad * 4
                + 2 * S_tile * E_pad * out_bytes
                + (S_tile * E_pad * 4 if n_k > 1 else 0))
    vmem_limit = min(64 << 20, max(32 << 20, (vmem_est * 3) // 2))

    out = pl.pallas_call(
        kernel,
        out_shape=jax.ShapeDtypeStruct((B, S_pad, E_pad), out_dtype),
        grid_spec=grid_spec,
        compiler_params=pltpu.CompilerParams(
            dimension_semantics=dim_sem,
            vmem_limit_bytes=int(vmem_limit)),
        cost_estimate=cost,
    )(patches, w, pos_eff)

    return out[:, :S, :E]


def patch_embedding_ref(x, conv_w, conv_b, cls_token, positions, patch_size):
    """Pure-JAX reference (mirrors the PyTorch forward, f32 throughout)."""
    B, C, H, W = x.shape
    ps = patch_size
    Hn, Wn = H // ps, W // ps
    E = conv_w.shape[0]
    proj = jax.lax.conv_general_dilated(
        x, conv_w, window_strides=(ps, ps), padding="VALID",
        dimension_numbers=("NCHW", "OIHW", "NCHW"))          # (B, E, Hn, Wn)
    proj = proj + conv_b.reshape(1, E, 1, 1)
    tokens = proj.reshape(B, E, Hn * Wn).transpose(0, 2, 1)   # b (h w) e
    cls = jnp.broadcast_to(cls_token, (B, 1, E))
    out = jnp.concatenate([cls, tokens], axis=1)
    return out + positions[None]


if __name__ == "__main__":
    # small shapes consistent with the module
    B, C, H, W = 2, 4, 16, 16
    patch_size = 8
    emb_size = 32
    N = (H // patch_size) * (W // patch_size)   # 4
    seq_len = N + 1                              # 5

    key = jax.random.PRNGKey(0)
    kx, kw, kb, kc, kp = jax.random.split(key, 5)
    x = jax.random.normal(kx, (B, C, H, W), dtype=jnp.float32)
    conv_w = jax.random.normal(kw, (emb_size, C, patch_size, patch_size),
                               dtype=jnp.float32) * 0.02
    conv_b = jax.random.normal(kb, (emb_size,), dtype=jnp.float32) * 0.02
    cls_token = jax.random.normal(kc, (1, 1, emb_size), dtype=jnp.float32)
    positions = jax.random.normal(kp, (seq_len, emb_size), dtype=jnp.float32)

    out = patch_embedding(x, conv_w, conv_b, cls_token, positions, patch_size)
    out = jax.block_until_ready(out)

    ref = patch_embedding_ref(x, conv_w, conv_b, cls_token, positions, patch_size)
    assert out.shape == (B, seq_len, emb_size), out.shape
    # bf16 MXU operands + bf16 output -> relaxed tolerance vs the f32 reference
    assert jnp.allclose(out.astype(jnp.float32), ref, atol=5e-2, rtol=5e-2), \
        "mismatch vs reference"
    print("KERNEL_OK")
</pallas_src>

<mosaic_0001>
module attributes {stable_mosaic.version = 11 : i64} {
  func.func @_pe_kernel_single_k(%arg0: i32, %arg1: i32, %arg2: memref<1x16x256xbf16, #tpu.memory_space<vmem>>, %arg3: memref<256x128xbf16, #tpu.memory_space<vmem>>, %arg4: memref<16x128xf32, #tpu.memory_space<vmem>>, %arg5: memref<1x16x128xbf16, #tpu.memory_space<vmem>>) attributes {dimension_semantics = [#tpu.dimension_semantics<parallel>, #tpu.dimension_semantics<parallel>], iteration_bounds = array<i64: 2, 1>, scalar_prefetch = 0 : i64, scratch_operands = 0 : i64, tpu.core_type = #tpu.core_type<tc>, window_params = [{transform_indices = @transform_0, window_bounds = array<i64: 1, 16, 256>}, {pipeline_mode = #tpu.pipeline_mode<synchronous>, transform_indices = @transform_1, window_bounds = array<i64: 256, 128>}, {transform_indices = @transform_2, window_bounds = array<i64: 16, 128>}, {transform_indices = @transform_3, window_bounds = array<i64: 1, 16, 128>}]} {
    %c0 = arith.constant 0 : index
    %c0_0 = arith.constant 0 : index
    %c0_1 = arith.constant 0 : index
    %0 = vector.load %arg2[%c0, %c0_0, %c0_1] : memref<1x16x256xbf16, #tpu.memory_space<vmem>>, vector<1x16x256xbf16>
    %1 = vector.shape_cast %0 : vector<1x16x256xbf16> to vector<16x256xbf16>
    %c0_2 = arith.constant 0 : index
    %c0_3 = arith.constant 0 : index
    %2 = vector.load %arg3[%c0_2, %c0_3] : memref<256x128xbf16, #tpu.memory_space<vmem>>, vector<256x128xbf16>
    %cst = arith.constant dense<0.000000e+00> : vector<16x128xf32>
    %3 = tpu.matmul %1, %2, %cst {dimension_numbers = #tpu.dot_dimension_numbers<[1], [0], [0], [1], [0, 0, 1, 1], [], []>} : vector<16x256xbf16>, vector<256x128xbf16>, vector<16x128xf32> -> vector<16x128xf32>
    %c0_4 = arith.constant 0 : index
    %c0_5 = arith.constant 0 : index
    %4 = vector.load %arg4[%c0_4, %c0_5] : memref<16x128xf32, #tpu.memory_space<vmem>>, vector<16x128xf32>
    %5 = arith.addf %3, %4 : vector<16x128xf32>
    %6 = arith.truncf %5 : vector<16x128xf32> to vector<16x128xbf16>
    %c0_6 = arith.constant 0 : index
    %c0_7 = arith.constant 0 : index
    %c0_8 = arith.constant 0 : index
    %7 = vector.load %arg5[%c0_6, %c0_7, %c0_8] : memref<1x16x128xbf16, #tpu.memory_space<vmem>>, vector<1x16x128xbf16>
    %8 = vector.shape_cast %7 : vector<1x16x128xbf16> to vector<16x128xbf16>
    %9 = vector.shape_cast %6 : vector<16x128xbf16> to vector<1x16x128xbf16>
    tpu.vector_store %arg5[%c0_6, %c0_7, %c0_8], %9 {strides = array<i32>} : memref<1x16x128xbf16, #tpu.memory_space<vmem>>, vector<1x16x128xbf16>,
    return
  }
  func.func @transform_0(%arg0: i32, %arg1: i32) -> (i32, i32, i32) {
    %c0_i32 = arith.constant 0 : i32
    %c0_i32_0 = arith.constant 0 : i32
    return %arg0, %arg1, %c0_i32 : i32, i32, i32
  }
  func.func @transform_1(%arg0: i32, %arg1: i32) -> (i32, i32) {
    %c0_i32 = arith.constant 0 : i32
    %c0_i32_0 = arith.constant 0 : i32
    %c0_i32_1 = arith.constant 0 : i32
    return %c0_i32, %c0_i32_0 : i32, i32
  }
  func.func @transform_2(%arg0: i32, %arg1: i32) -> (i32, i32) {
    %c0_i32 = arith.constant 0 : i32
    %c0_i32_0 = arith.constant 0 : i32
    return %arg1, %c0_i32 : i32, i32
  }
  func.func @transform_3(%arg0: i32, %arg1: i32) -> (i32, i32, i32) {
    %c0_i32 = arith.constant 0 : i32
    %c0_i32_0 = arith.constant 0 : i32
    return %arg0, %arg1, %c0_i32 : i32, i32, i32
  }
}

</mosaic_0001>

<llo_original>
// kernel: tpu_custom_call.1
$region0: #{tpu_custom_call.1}
  #allocation0 [shape = 'u32[]', space=smem, size = 0x4, offset = 0x4, fixed_abs, tag = 'smem constant byte address 0x4 - core index']
  #allocation1 [shape = 'u32[144,128]{1,0:T(1,128)}', space=vmem, size = 0x12000, scoped, tag = 'internal scratch']
  %s0 = inlined_call_operand.hbm [shape: bf16[2,16,256], index: 0, kind: input, shape index: {}]
  %s1 = inlined_call_operand.hbm [shape: bf16[256,128], index: 1, kind: input, shape index: {}]
  %s2 = inlined_call_operand.hbm [shape: f32[16,128], index: 2, kind: input, shape index: {}]
  %s3 = inlined_call_operand.hbm [shape: bf16[2,16,128], index: 3, kind: output, shape index: {}]
  %s4 = sld [smem:[#allocation0]]
  $region57: #{tpu_custom_call.1} parent=0
    _
  %s6 = ssub.s32 1, %s4
  %s7 = scalar_select 0, %s6, %s4
  $region1: #{tpu_custom_call.1} parent=0
    #allocation2 [shape = 'u8[16384]{0}', space=vmem, size = 0x4000, scoped, tag = 'input window, operand 0']
    #allocation3 [shape = 's32[2]{0}', space=sflag, size = 0x8, scoped, tag = 'scoped memory for tpu_custom_call.1']
    #allocation4 [shape = 's32[2]{0}', space=sflag, size = 0x8, scoped, tag = 'scoped memory for tpu_custom_call.1']
    #allocation5 [shape = 'u8[65536]{0}', space=vmem, size = 0x10000, scoped, tag = 'input window, operand 1, single buffered']
    #allocation6 [shape = 's32[1]{0}', space=sflag, size = 0x4, scoped, tag = 'scoped memory for tpu_custom_call.1']
    #allocation7 [shape = 'u8[8192]{0}', space=vmem, size = 0x2000, scoped, tag = 'input window, operand 2, single buffered']
    #allocation8 [shape = 'u8[8192]{0}', space=vmem, size = 0x2000, scoped, tag = 'output window, operand 0']
    %8 = vsyncpa [#allocation3], 0
    %s9 = scalar_lea.sflag [#allocation3], 1
    %10 = vsyncpa %s9, 0
    %11 = vsyncpa [#allocation6], 0
    %12 = vsyncpa [#allocation4], 0
    %s13 = scalar_lea.sflag [#allocation4], 1
    %14 = vsyncpa %s13, 0
    loop: start=0, step=1, limit=4
    $region2: #{tpu_custom_call.1} parent=1 // loop_pre_header
      _
    $region3: #{tpu_custom_call.1} parent=1 // loop_header
      %s16 = sphi 0, %s20
      %p17 = scmp.ge.s32.totalorder %s16, 4
      %s23 = sphi 0, %s35
      %s24 = sphi 0, %s31
      %s25 = sphi 0, %s23
      %s26 = sphi 0, %s24
      %s27 = sphi 0, %s25
      %s28 = sphi 0, %s26
      %s40 = sphi 0, %s42
      %s43 = sphi 0, %s40
      %s44 = sphi 0, %s43
      %s60 = sphi 0, %s44
      %s64 = sphi 0, %s64
      %s66 = sphi 0, %s64
      %s67 = sphi 0, %s66
      %s81 = sphi 0, %s67
      %s87 = sphi 0, %s89
      %s90 = sphi 0, %s87
      %s91 = sphi 0, %s90
      %s107 = sphi 0, %s91
      %s115 = sphi 0, %s117
      %s118 = sphi 0, %s115
      %s119 = sphi 0, %s118
      %s135 = sphi 0, %s119
    $region4: #{tpu_custom_call.1} parent=1 // loop_header_branch
      %19 = sbr.rel (%p17) target = $region8
    $region5: #{tpu_custom_call.1} parent=1 // loop_body
      %s21 = ssub.s32 %s16, 1
      %s22 = ssub.s32 %s16, 2
      %s29 = sadd.s32 1, %s24
      %p30 = scmp.ge.s32.totalorder %s29, 1
      %s31 = scalar_select %p30, 0, %s29
      %s32 = sadd.s32 1, %s23
      %s33 = scalar_select %p30, %s32, %s23
      %p34 = scmp.ge.s32.totalorder %s33, 2
      %s35 = scalar_select %p34, 0, %s33
      %s36 = ssub.s32 %s23, %s35
      %s37 = ssub.s32 %s24, %s31
      %s38 = sor.u32 %s36, %s37
      %p39 = scmp.eq.s32.totalorder %s38, 0
      %s41 = sadd.s32 %s40, 1
      %s42 = scalar_select %p39, %s40, %s41
      %p45 = pneg %p39
      %p46 = scmp.eq.s32.totalorder %s16, 1
      %p47 = por %p45, %p46
      %p48 = scmp.ne.s32.totalorder %s40, %s43
      %p49 = scmp.eq.s32.totalorder %s16, 0
      %p50 = por %p48, %p49
      %p51 = scmp.ne.s32.totalorder %s40, %s43
      %p52 = scmp.eq.s32.totalorder %s21, 1
      %p53 = por %p51, %p52
      %p54 = scmp.ne.s32.totalorder %s43, %s44
      %p55 = scmp.eq.s32.totalorder %s21, 0
      %p56 = por %p54, %p55
      %p57 = scmp.ne.s32.totalorder %s43, %s44
      %p58 = scmp.eq.s32.totalorder %s22, 1
      %p59 = por %p57, %p58
      %p61 = scmp.ne.s32.totalorder %s44, %s60
      %p62 = scmp.eq.s32.totalorder %s22, 0
      %p63 = por %p61, %p62
      %s65 = sadd.s32 %s64, 1
      %p68 = scmp.eq.s32.totalorder %s16, 1
      %p69 = scmp.ne.s32.totalorder %s64, %s66
      %p70 = scmp.eq.s32.totalorder %s16, 0
      %p71 = por %p69, %p70
      %p72 = scmp.ne.s32.totalorder %s64, %s66
      %p73 = scmp.eq.s32.totalorder %s21, 1
      %p74 = por %p72, %p73
      %p75 = scmp.ne.s32.totalorder %s66, %s67
      %p76 = scmp.eq.s32.totalorder %s21, 0
      %p77 = por %p75, %p76
      %p78 = scmp.ne.s32.totalorder %s66, %s67
      %p79 = scmp.eq.s32.totalorder %s22, 1
      %p80 = por %p78, %p79
      %p82 = scmp.ne.s32.totalorder %s67, %s81
      %p83 = scmp.eq.s32.totalorder %s22, 0
      %p84 = por %p82, %p83
      %s85 = ssub.s32 %s24, %s31
      %p86 = scmp.eq.s32.totalorder %s85, 0
      %s88 = sadd.s32 %s87, 1
      %s89 = scalar_select %p86, %s87, %s88
      %p92 = pneg %p86
      %p93 = scmp.eq.s32.totalorder %s16, 1
      %p94 = por %p92, %p93
      %p95 = scmp.ne.s32.totalorder %s87, %s90
      %p96 = scmp.eq.s32.totalorder %s16, 0
      %p97 = por %p95, %p96
      %p98 = scmp.ne.s32.totalorder %s87, %s90
      %p99 = scmp.eq.s32.totalorder %s21, 1
      %p100 = por %p98, %p99
      %p101 = scmp.ne.s32.totalorder %s90, %s91
      %p102 = scmp.eq.s32.totalorder %s21, 0
      %p103 = por %p101, %p102
      %p104 = scmp.ne.s32.totalorder %s90, %s91
      %p105 = scmp.eq.s32.totalorder %s22, 1
      %p106 = por %p104, %p105
      %p108 = scmp.ne.s32.totalorder %s91, %s107
      %p109 = scmp.eq.s32.totalorder %s22, 0
      %p110 = por %p108, %p109
      %s111 = ssub.s32 %s23, %s35
      %s112 = ssub.s32 %s24, %s31
      %s113 = sor.u32 %s111, %s112
      %p114 = scmp.eq.s32.totalorder %s113, 0
      %s116 = sadd.s32 %s115, 1
      %s117 = scalar_select %p114, %s115, %s116
      %p120 = pneg %p114
      %p121 = scmp.eq.s32.totalorder %s16, 1
      %p122 = por %p120, %p121
      %p123 = scmp.ne.s32.totalorder %s115, %s118
      %p124 = scmp.eq.s32.totalorder %s16, 0
      %p125 = por %p123, %p124
      %p126 = scmp.ne.s32.totalorder %s115, %s118
      %p127 = scmp.eq.s32.totalorder %s21, 1
      %p128 = por %p126, %p127
      %p129 = scmp.ne.s32.totalorder %s118, %s119
      %p130 = scmp.eq.s32.totalorder %s21, 0
      %p131 = por %p129, %p130
      %p132 = scmp.ne.s32.totalorder %s118, %s119
      %p133 = scmp.eq.s32.totalorder %s22, 1
      %p134 = por %p132, %p133
      %p136 = scmp.ne.s32.totalorder %s119, %s135
      %p137 = scmp.eq.s32.totalorder %s22, 0
      %p138 = por %p136, %p137
      %p139 = scmp.le.s32.totalorder 1, %s16
      %p140 = scmp.lt.s32.totalorder %s16, 3
      %p141 = pnand %p139, %p140
      %p142 = pneg %p141
      // Predicated region
      $region9: #{tpu_custom_call.1} parent=5 // pred_check
        _
      $region10: #{tpu_custom_call.1} parent=5 // pred_check_branch
        %144 = sbr.rel (%p141) target = $region12
      $region11: #{tpu_custom_call.1} parent=5 // pred_region
        %s145 = ssub.s32 %s16, 1
        // Predicated region
        $region13: #{tpu_custom_call.1} parent=11 // pred_check
          %p146 = pneg %p77
        $region14: #{tpu_custom_call.1} parent=11 // pred_check_branch
          %148 = sbr.rel (%p146) target = $region16
        $region15: #{tpu_custom_call.1} parent=11 // pred_region
          %s150 = ssub.s32 2048, 2048
          %151 = vsyncadd [#allocation6], %s150
          %s152 = sshll.u32 [#allocation5], 4
          %s153 = int_to_ptr.vmem [resolvable:$true] %s152
          %158 = dma.hbm_to_vmem [thread:$0]  %s1, 2048, %s153, [#allocation6], 64, 64, 4
        $region16: #{tpu_custom_call.1} parent=11 // pred_fallthru
          _
        // Predicated region
        $region17: #{tpu_custom_call.1} parent=11 // pred_check
          %p159 = pneg %p103
        $region18: #{tpu_custom_call.1} parent=11 // pred_check_branch
          %161 = sbr.rel (%p159) target = $region20
        $region19: #{tpu_custom_call.1} parent=11 // pred_region
          %s162 = smul.u32 2, %s26
          %s164 = ssub.s32 256, 256
          %165 = vsyncadd [#allocation6], %s164
          %s166 = smul.addr %s162, 128
          %s167 = scalar_lea.hbm %s2, %s166
          %s168 = sshll.u32 [#allocation7], 4
          %s169 = int_to_ptr.vmem [resolvable:$true] %s168
          %174 = dma.hbm_to_vmem [thread:$0]  %s167, 256, %s169, [#allocation6], 128, 128, 8
        $region20: #{tpu_custom_call.1} parent=11 // pred_fallthru
          _
      $region12: #{tpu_custom_call.1} parent=5 // pred_fallthru
        _
      %p175 = scmp.lt.s32.totalorder %s16, 2
      // Predicated region
      $region21: #{tpu_custom_call.1} parent=5 // pred_check
        %p176 = pneg %p175
      $region22: #{tpu_custom_call.1} parent=5 // pred_check_branch
        %178 = sbr.rel (%p176) target = $region24
      $region23: #{tpu_custom_call.1} parent=5 // pred_region
        // Predicated region
        $region25: #{tpu_custom_call.1} parent=23 // pred_check
          %p179 = pneg %p50
        $region26: #{tpu_custom_call.1} parent=23 // pred_check_branch
          %181 = sbr.rel (%p179) target = $region28
        $region27: #{tpu_custom_call.1} parent=23 // pred_region
          %s182 = sand.u32 %s40, 1
          %s183 = scalar_lea.sflag [#allocation3], %s182
          %s184 = sand.u32 %s40, 1
          %s185 = smul.addr %s184, 16
          %s186 = scalar_lea.vmem [#allocation2], %s185
          %s187 = smul.u32 2, %s24
          %s189 = ssub.s32 256, 256
          %190 = vsyncadd %s183, %s189
          %s191 = smul.addr %s187, 2
          %s192 = smul.addr %s23, 4
          %s193 = sadd.s32 %s191, %s192
          %s194 = smul.addr %s193, 64
          %s195 = scalar_lea.hbm %s0, %s194
          %s196 = sshll.u32 %s186, 4
          %s197 = int_to_ptr.vmem [resolvable:$true] %s196
          %202 = dma.hbm_to_vmem [thread:$0]  %s195, 256, %s197, %s183, 128, 128, 8
        $region28: #{tpu_custom_call.1} parent=23 // pred_fallthru
          _
      $region24: #{tpu_custom_call.1} parent=5 // pred_fallthru
        _
      %p203 = scmp.le.s32.totalorder 1, %s16
      %p204 = scmp.lt.s32.totalorder %s16, 3
      %p205 = pnand %p203, %p204
      %p206 = pneg %p205
      // Predicated region
      $region29: #{tpu_custom_call.1} parent=5 // pred_check
        _
      $region30: #{tpu_custom_call.1} parent=5 // pred_check_branch
        %208 = sbr.rel (%p205) target = $region32
      $region31: #{tpu_custom_call.1} parent=5 // pred_region
        %s209 = ssub.s32 %s16, 1
        %s210 = sand.u32 %s43, 1
        %s211 = scalar_lea.sflag [#allocation3], %s210
        %s212 = sand.u32 %s43, 1
        %s213 = smul.addr %s212, 16
        %s214 = scalar_lea.vmem [#allocation2], %s213
        // Predicated region
        $region33: #{tpu_custom_call.1} parent=31 // pred_check
          %p215 = pneg %p56
        $region34: #{tpu_custom_call.1} parent=31 // pred_check_branch
          %217 = sbr.rel (%p215) target = $region36
        $region35: #{tpu_custom_call.1} parent=31 // pred_region
          %218 = dma.done %s211, 256
        $region36: #{tpu_custom_call.1} parent=31 // pred_fallthru
          _
        // Predicated region
        $region37: #{tpu_custom_call.1} parent=31 // pred_check
          %p219 = pneg %p77
        $region38: #{tpu_custom_call.1} parent=31 // pred_check_branch
          %221 = sbr.rel (%p219) target = $region40
        $region39: #{tpu_custom_call.1} parent=31 // pred_region
          %222 = dma.done [#allocation6], 2048
        $region40: #{tpu_custom_call.1} parent=31 // pred_fallthru
          _
        // Predicated region
        $region41: #{tpu_custom_call.1} parent=31 // pred_check
          %p223 = pneg %p103
        $region42: #{tpu_custom_call.1} parent=31 // pred_check_branch
          %225 = sbr.rel (%p223) target = $region44
        $region43: #{tpu_custom_call.1} parent=31 // pred_region
          %226 = dma.done [#allocation6], 256
        $region44: #{tpu_custom_call.1} parent=31 // pred_fallthru
          _
        %s227 = sand.u32 %s43, 1
        %s228 = scalar_lea.sflag [#allocation3], %s227
        %s229 = sand.u32 %s43, 1
        %s230 = smul.addr %s229, 16
        %s231 = scalar_lea.vmem [#allocation2], %s230
        %p232 = pneg %p56
        %p233 = pneg %p53
        %p234 = pneg %p77
        %p235 = pneg %p74
        %p236 = pneg %p103
        %p237 = pneg %p100
        %p238 = pneg %p131
        %p239 = pneg %p128
        %s240 = sand.u32 %s118, 1
        %s241 = scalar_lea.sflag [#allocation4], %s240
        %s242 = sand.u32 %s118, 1
        %s243 = smul.addr %s242, 8
        %s244 = scalar_lea.vmem [#allocation8], %s243
        %s245 = smul.u32 2, %s26
        %s246 = smul.u32 2, %s26
        %s247 = smul.u32 2, %s26
        %v249 = vld [vmem:[%s214] sm:$0xff]
        %v250 = vld [vmem:[%s214 + $0x8] sm:$0xff]
        %v251 = vld [vmem:[#allocation5] sm:$0xf]
        %v252 = vld [vmem:[#allocation5 + $0x4] sm:$0xf]
        %v253 = vld [vmem:[#allocation5 + $0x8] sm:$0xf]
        %v254 = vld [vmem:[#allocation5 + $0xc] sm:$0xf]
        %v255 = vld [vmem:[#allocation5 + $0x10] sm:$0xf]
        %v256 = vld [vmem:[#allocation5 + $0x14] sm:$0xf]
        %v257 = vld [vmem:[#allocation5 + $0x18] sm:$0xf]
        %v258 = vld [vmem:[#allocation5 + $0x1c] sm:$0xf]
        %v259 = vld [vmem:[#allocation5 + $0x20] sm:$0xf]
        %v260 = vld [vmem:[#allocation5 + $0x24] sm:$0xf]
        %v261 = vld [vmem:[#allocation5 + $0x28] sm:$0xf]
        %v262 = vld [vmem:[#allocation5 + $0x2c] sm:$0xf]
        %v263 = vld [vmem:[#allocation5 + $0x30] sm:$0xf]
        %v264 = vld [vmem:[#allocation5 + $0x34] sm:$0xf]
        %v265 = vld [vmem:[#allocation5 + $0x38] sm:$0xf]
        %v266 = vld [vmem:[#allocation5 + $0x3c] sm:$0xf]
        %v267 = vld [vmem:[#allocation5 + $0x40] sm:$0xf]
        %v268 = vld [vmem:[#allocation5 + $0x44] sm:$0xf]
        %v269 = vld [vmem:[#allocation5 + $0x48] sm:$0xf]
        %v270 = vld [vmem:[#allocation5 + $0x4c] sm:$0xf]
        %v271 = vld [vmem:[#allocation5 + $0x50] sm:$0xf]
        %v272 = vld [vmem:[#allocation5 + $0x54] sm:$0xf]
        %v273 = vld [vmem:[#allocation5 + $0x58] sm:$0xf]
        %v274 = vld [vmem:[#allocation5 + $0x5c] sm:$0xf]
        %v275 = vld [vmem:[#allocation5 + $0x60] sm:$0xf]
        %v276 = vld [vmem:[#allocation5 + $0x64] sm:$0xf]
        %v277 = vld [vmem:[#allocation5 + $0x68] sm:$0xf]
        %v278 = vld [vmem:[#allocation5 + $0x6c] sm:$0xf]
        %v279 = vld [vmem:[#allocation5 + $0x70] sm:$0xf]
        %v280 = vld [vmem:[#allocation5 + $0x74] sm:$0xf]
        %v281 = vld [vmem:[#allocation5 + $0x78] sm:$0xf]
        %v282 = vld [vmem:[#allocation5 + $0x7c] sm:$0xf]
        %v283 = vld [vmem:[#allocation7] sm:$0xff]
        %v284 = vld [vmem:[#allocation7 + $0x8] sm:$0xff]
        %v287 = vunpack.c.l.b16 %v249
        %v288 = vunpack.c.h.b16 %v249
        %v289 = vunpack.c.l.b16 %v250
        %v290 = vunpack.c.h.b16 %v250
        %v291 = vpack.c.b16 %v289, %v287
        %v292 = vpack.c.b16 %v290, %v288
        %v327 = vunpack.c.l.b16 %v251
        %v328 = vunpack.c.l.b16 %v252
        %v329 = vunpack.c.l.b16 %v253
        %v330 = vunpack.c.l.b16 %v254
        %v331 = vunpack.c.l.b16 %v255
        %v332 = vunpack.c.l.b16 %v256
        %v333 = vunpack.c.l.b16 %v257
        %v334 = vunpack.c.l.b16 %v258
        %v335 = vunpack.c.l.b16 %v259
        %v336 = vunpack.c.l.b16 %v260
        %v337 = vunpack.c.l.b16 %v261
        %v338 = vunpack.c.l.b16 %v262
        %v339 = vunpack.c.l.b16 %v263
        %v340 = vunpack.c.l.b16 %v264
        %v341 = vunpack.c.l.b16 %v265
        %v342 = vunpack.c.l.b16 %v266
        %v343 = vunpack.c.l.b16 %v267
        %v344 = vunpack.c.l.b16 %v268
        %v345 = vunpack.c.l.b16 %v269
        %v346 = vunpack.c.l.b16 %v270
        %v347 = vunpack.c.l.b16 %v271
        %v348 = vunpack.c.l.b16 %v272
        %v349 = vunpack.c.l.b16 %v273
        %v350 = vunpack.c.l.b16 %v274
        %v351 = vunpack.c.l.b16 %v275
        %v352 = vunpack.c.l.b16 %v276
        %v353 = vunpack.c.l.b16 %v277
        %v354 = vunpack.c.l.b16 %v278
        %v355 = vunpack.c.l.b16 %v279
        %v356 = vunpack.c.l.b16 %v280
        %v357 = vunpack.c.l.b16 %v281
        %v358 = vunpack.c.l.b16 %v282
        %v359 = vpack.c.b16 %v328, %v327
        %v360 = vpack.c.b16 %v330, %v329
        %v361 = vpack.c.b16 %v332, %v331
        %v362 = vpack.c.b16 %v334, %v333
        %v363 = vpack.c.b16 %v336, %v335
        %v364 = vpack.c.b16 %v338, %v337
        %v365 = vpack.c.b16 %v340, %v339
        %v366 = vpack.c.b16 %v342, %v341
        %v367 = vpack.c.b16 %v344, %v343
        %v368 = vpack.c.b16 %v346, %v345
        %v369 = vpack.c.b16 %v348, %v347
        %v370 = vpack.c.b16 %v350, %v349
        %v371 = vpack.c.b16 %v352, %v351
        %v372 = vpack.c.b16 %v354, %v353
        %v373 = vpack.c.b16 %v356, %v355
        %v374 = vpack.c.b16 %v358, %v357
        %391 = vmatprep.subr.bf16.mxu0 0
        %392 = vmatpush1.bf16.msra.mxu0 %v359
        %393 = vmatprep.subr.bf16.mxu0 0
        %394 = vmatpush1.bf16.msra.mxu0 %v360
        %395 = vmatprep.subr.bf16.mxu0 0
        %396 = vmatpush1.bf16.msra.mxu0 %v361
        %397 = vmatprep.subr.bf16.mxu0 0
        %398 = vmatpush1.bf16.msra.mxu0 %v362
        %399 = vmatprep.subr.bf16.mxu0 0
        %400 = vmatpush1.bf16.msra.mxu0 %v363
        %401 = vmatprep.subr.bf16.mxu0 0
        %402 = vmatpush1.bf16.msra.mxu0 %v364
        %403 = vmatprep.subr.bf16.mxu0 0
        %404 = vmatpush1.bf16.msra.mxu0 %v365
        %405 = vmatprep.subr.bf16.mxu0 0
        %406 = vmatpush1.bf16.msra.mxu0 %v366
        %407 = vmatprep.subr.bf16.mxu0 0
        %408 = vmatpush1.bf16.msra.mxu0 %v367
        %409 = vmatprep.subr.bf16.mxu0 0
        %410 = vmatpush1.bf16.msra.mxu0 %v368
        %411 = vmatprep.subr.bf16.mxu0 0
        %412 = vmatpush1.bf16.msra.mxu0 %v369
        %413 = vmatprep.subr.bf16.mxu0 0
        %414 = vmatpush1.bf16.msra.mxu0 %v370
        %415 = vmatprep.subr.bf16.mxu0 0
        %416 = vmatpush1.bf16.msra.mxu0 %v371
        %417 = vmatprep.subr.bf16.mxu0 0
        %418 = vmatpush1.bf16.msra.mxu0 %v372
        %419 = vmatprep.subr.bf16.mxu0 0
        %420 = vmatpush1.bf16.msra.mxu0 %v373
        %421 = vmatprep.subr.bf16.mxu0 0
        %422 = vmatpush1.bf16.msra.mxu0 %v374
        %423 = vmatprep.mubr.bf16.mxu0 %v292
        %424 = vmatmul.mubr.bf16.gmra.mrb[0].mxu0 %v291
        %v425 = vpop.f32.mrb[0].mxu0
        %v426 = vadd.f32 %v283, %v425
        %v427 = vpop.f32.mrb[0].mxu0
        %v428 = vpop.f32.mrb[0].mxu0
        %v429 = vadd.f32 %v284, %v428
        %v430 = vpop.f32.mrb[0].mxu0
        %431 = vdwg.mxu0
        %v432 = vpack.c.bf16 %v429, %v426
        %v434 = vunpack.c.l.b16 %v432
        %v435 = vunpack.c.h.b16 %v432
        %v436 = vpack.c.b16 %v434, %v434
        %v437 = vpack.c.b16 %v435, %v435
        %440 = vst [vmem:[%s244] sm:$0xf] %v436
        %441 = vst [vmem:[%s244 + $0x4] sm:$0xf] %v437
        %s442 = sand.u32 %s118, 1
        %s443 = scalar_lea.sflag [#allocation4], %s442
        %s444 = sand.u32 %s118, 1
        %s445 = smul.addr %s444, 8
        %s446 = scalar_lea.vmem [#allocation8], %s445
        // Predicated region
        $region45: #{tpu_custom_call.1} parent=31 // pred_check
          %p447 = pneg %p128
        $region46: #{tpu_custom_call.1} parent=31 // pred_check_branch
          %449 = sbr.rel (%p447) target = $region48
        $region47: #{tpu_custom_call.1} parent=31 // pred_region
          %s450 = smul.u32 2, %s26
          %s452 = ssub.s32 128, 128
          %453 = vsyncadd %s443, %s452
          %s454 = smul.addr %s25, 2
          %s455 = sadd.s32 %s450, %s454
          %s456 = smul.addr %s455, 64
          %s457 = scalar_lea.hbm %s3, %s456
          %s458 = sshll.u32 %s446, 4
          %s459 = int_to_ptr.vmem [resolvable:$true] %s458
          %464 = dma.vmem_to_hbm [thread:$0]  %s459, 128, %s457, %s443, 64, 64, 4
        $region48: #{tpu_custom_call.1} parent=31 // pred_fallthru
          _
      $region32: #{tpu_custom_call.1} parent=5 // pred_fallthru
        _
      %p465 = scmp.le.s32.totalorder 2, %s16
      // Predicated region
      $region49: #{tpu_custom_call.1} parent=5 // pred_check
        %p466 = pneg %p465
      $region50: #{tpu_custom_call.1} parent=5 // pred_check_branch
        %468 = sbr.rel (%p466) target = $region52
      $region51: #{tpu_custom_call.1} parent=5 // pred_region
        %s469 = ssub.s32 %s16, 2
        // Predicated region
        $region53: #{tpu_custom_call.1} parent=51 // pred_check
          %p470 = pneg %p134
        $region54: #{tpu_custom_call.1} parent=51 // pred_check_branch
          %472 = sbr.rel (%p470) target = $region56
        $region55: #{tpu_custom_call.1} parent=51 // pred_region
          %s473 = sand.u32 %s119, 1
          %s474 = scalar_lea.sflag [#allocation4], %s473
          %s475 = sand.u32 %s119, 1
          %s476 = smul.addr %s475, 8
          %s477 = scalar_lea.vmem [#allocation8], %s476
          %478 = dma.done %s474, 128
        $region56: #{tpu_custom_call.1} parent=51 // pred_fallthru
          _
      $region52: #{tpu_custom_call.1} parent=5 // pred_fallthru
        _
    $region6: #{tpu_custom_call.1} parent=1 // loop_footer
      %s20 = sadd.s32 1, %s16
    $region7: #{tpu_custom_call.1} parent=1 // loop_footer_branch
      %15 = sbr.rel target = $region3
    $region8: #{tpu_custom_call.1} parent=1 // loop_exit
      _
    %479 = vsyncpa [#allocation3], 1
    %s480 = scalar_lea.sflag [#allocation3], 1
    %481 = vsyncpa %s480, 1
    %482 = vsyncpa [#allocation6], 1
    %483 = vsyncpa [#allocation4], 1
    %s484 = scalar_lea.sflag [#allocation4], 1
    %485 = vsyncpa %s484, 1

</llo_original>
